<compile_context>
chip_gen: v6e
topology: v6e:2x2x1
jax: 0.10.0
libtpu: 0.0.40
codegen_flags: <defaults>
</compile_context>

<pallas_src>
import jax
import jax.numpy as jnp
from jax.experimental import pallas as pl
from jax.experimental.pallas import tpu as pltpu


# ------------------------------ Pallas kernel --------------------------------

def _channel_attention_kernel(x_ref, w1_ref, w2_ref, o_ref):
    """x_ref: [tm, C] bf16 pixels; w1: [C, C//16]; w2: [C//16, C] (pre-doubled)."""
    # fc1 (1x1 conv, no bias) + ReLU.  MXU with f32 accumulation.
    h = jnp.dot(x_ref[...], w1_ref[...], preferred_element_type=jnp.float32)
    h = jnp.maximum(h, 0.0)
    # fc2 (1x1 conv, no bias).  The max_out+avg_out doubling is already folded
    # into w2 by the wrapper (exact), so no extra epilogue add is needed.
    z = jnp.dot(h.astype(w2_ref.dtype), w2_ref[...],
                preferred_element_type=jnp.float32)
    # sigmoid: exp on the EUP, the rest on the VPU; store f32, lane-dense in C.
    o_ref[...] = (1.0 / (1.0 + jnp.exp(-z))).astype(o_ref.dtype)


# ------------------------------ host-side glue --------------------------------

def _round_up(x, n):
    return pl.cdiv(x, n) * n


def _compiler_params():
    # Generation-aware VMEM limit (v7x only has 64 MiB/TC); fall back to the
    # compiler default if the query is unavailable.  Tiles are small enough to
    # fit under the default scoped limit on every generation anyway.
    vmem_limit = None
    try:
        cap = int(pltpu.get_tpu_info().vmem_capacity_bytes)
        vmem_limit = cap // 2          # leave headroom for double-buffering
    except Exception:
        pass
    return pltpu.CompilerParams(dimension_semantics=("parallel",),
                                vmem_limit_bytes=vmem_limit)


def channel_attention(x_nchw, fc1_w, fc2_w, *, tm=256):
    """CBAM ChannelAttention forward.

    x_nchw: [N, C, H, W] float32 (PyTorch layout).
    fc1_w:  [C//16, C, 1, 1]  (Conv2d weight, bias=False)
    fc2_w:  [C, C//16, 1, 1]  (Conv2d weight, bias=False)
    returns [N, C, H, W] float32  == sigmoid(fc2(relu(fc1(x))) * 2)
    """
    n, c, h, w = x_nchw.shape
    cmid = fc1_w.shape[0]
    assert fc1_w.shape == (cmid, c, 1, 1), fc1_w.shape
    assert fc2_w.shape == (c, cmid, 1, 1), fc2_w.shape

    # MaxPool2d(1)/AvgPool2d(1) are identities -> both branches are identical.
    # NCHW -> NHWC -> [M, C] so the 1x1 convs become plain per-pixel matmuls
    # with a lane-dense channel axis (no im2col replication needed).
    x2d = jnp.transpose(x_nchw, (0, 2, 3, 1)).reshape(n * h * w, c)
    m = n * h * w

    tm = _round_up(min(tm, m), 8)          # row tile, (8,128)-rule compliant
    m_pad = _round_up(m, tm)
    if m_pad != m:
        x2d = jnp.pad(x2d, ((0, m_pad - m), (0, 0)))

    # bf16 MXU operands, f32 accumulation inside the kernel.
    xb = x2d.astype(jnp.bfloat16)
    w1 = jnp.transpose(fc1_w[:, :, 0, 0]).astype(jnp.bfloat16)          # [C, Cmid]
    # Fold the (max_out + avg_out) doubling into fc2's weights (x2 is exact).
    w2 = (2.0 * jnp.transpose(fc2_w[:, :, 0, 0])).astype(jnp.bfloat16)  # [Cmid, C]

    grid = (m_pad // tm,)
    cost = pl.CostEstimate(
        flops=4 * m_pad * c * cmid,                 # two matmuls
        transcendentals=m_pad * c,                  # exp in the sigmoid
        bytes_accessed=(xb.size * 2 + m_pad * c * 4 + (w1.size + w2.size) * 2),
    )

    out = pl.pallas_call(
        _channel_attention_kernel,
        out_shape=jax.ShapeDtypeStruct((m_pad, c), jnp.float32),
        grid=grid,
        in_specs=[
            pl.BlockSpec((tm, c), lambda i: (i, 0)),     # streamed pixel tiles
            pl.BlockSpec((c, cmid), lambda i: (0, 0)),   # weights stay resident
            pl.BlockSpec((cmid, c), lambda i: (0, 0)),
        ],
        out_specs=pl.BlockSpec((tm, c), lambda i: (i, 0)),
        compiler_params=_compiler_params(),
        cost_estimate=cost,
    )(xb, w1, w2)

    out = out[:m].reshape(n, h, w, c)
    return jnp.transpose(out, (0, 3, 1, 2))              # back to NCHW


# ------------------------------- reference ------------------------------------

def _reference(x, fc1_w, fc2_w):
    """Pure-JAX f32 reference, written exactly like the PyTorch forward."""
    w1 = fc1_w[:, :, 0, 0]          # [Cmid, C]
    w2 = fc2_w[:, :, 0, 0]          # [C, Cmid]

    def branch(t):
        hid = jnp.einsum('nchw,dc->ndhw', t, w1)
        hid = jnp.maximum(hid, 0.0)
        return jnp.einsum('ndhw,cd->nchw', hid, w2)

    max_out = branch(x)             # MaxPool2d(1) == identity
    avg_out = branch(x)             # AvgPool2d(1) == identity
    return jax.nn.sigmoid(max_out + avg_out)


# --------------------------------- main ---------------------------------------

if __name__ == "__main__":
    key = jax.random.PRNGKey(0)
    kx, k1, k2 = jax.random.split(key, 3)

    # Small shapes consistent with the module (in_channel must be >= 16 so that
    # in_channel // 16 >= 1); C=128 also keeps the output lane-dense.
    n, c, hh, ww = 2, 128, 16, 16
    cmid = c // 16

    x = jax.random.normal(kx, (n, c, hh, ww), jnp.float32)
    # PyTorch Conv2d default init: U(-1/sqrt(fan_in), 1/sqrt(fan_in)).
    b1 = 1.0 / (c ** 0.5)
    fc1_w = jax.random.uniform(k1, (cmid, c, 1, 1), jnp.float32, -b1, b1)
    b2 = 1.0 / (cmid ** 0.5)
    fc2_w = jax.random.uniform(k2, (c, cmid, 1, 1), jnp.float32, -b2, b2)

    fwd = jax.jit(channel_attention)
    out = jax.block_until_ready(fwd(x, fc1_w, fc2_w))

    assert out.shape == (n, c, hh, ww), out.shape
    assert bool(jnp.all(jnp.isfinite(out)))

    ref = _reference(x, fc1_w, fc2_w)
    max_err = float(jnp.max(jnp.abs(out - ref)))
    assert max_err < 1e-2, f"max abs err vs reference: {max_err}"

    print("KERNEL_OK")
</pallas_src>

<mosaic_0001>
module attributes {stable_mosaic.version = 11 : i64} {
  func.func @_channel_attention_kernel(%arg0: i32, %arg1: memref<256x128xbf16, #tpu.memory_space<vmem>>, %arg2: memref<128x8xbf16, #tpu.memory_space<vmem>>, %arg3: memref<8x128xbf16, #tpu.memory_space<vmem>>, %arg4: memref<256x128xf32, #tpu.memory_space<vmem>>) attributes {dimension_semantics = [#tpu.dimension_semantics<parallel>], iteration_bounds = array<i64: 2>, scalar_prefetch = 0 : i64, scratch_operands = 0 : i64, tpu.core_type = #tpu.core_type<tc>, window_params = [{transform_indices = @transform_0, window_bounds = array<i64: 256, 128>}, {pipeline_mode = #tpu.pipeline_mode<synchronous>, transform_indices = @transform_1, window_bounds = array<i64: 128, 8>}, {pipeline_mode = #tpu.pipeline_mode<synchronous>, transform_indices = @transform_2, window_bounds = array<i64: 8, 128>}, {transform_indices = @transform_3, window_bounds = array<i64: 256, 128>}]} {
    %c0 = arith.constant 0 : index
    %c0_0 = arith.constant 0 : index
    %0 = vector.load %arg1[%c0, %c0_0] : memref<256x128xbf16, #tpu.memory_space<vmem>>, vector<256x128xbf16>
    %c0_1 = arith.constant 0 : index
    %c0_2 = arith.constant 0 : index
    %1 = vector.load %arg2[%c0_1, %c0_2] : memref<128x8xbf16, #tpu.memory_space<vmem>>, vector<128x8xbf16>
    %cst = arith.constant dense<0.000000e+00> : vector<256x8xf32>
    %2 = tpu.matmul %0, %1, %cst {dimension_numbers = #tpu.dot_dimension_numbers<[1], [0], [0], [1], [0, 0, 1, 1], [], []>} : vector<256x128xbf16>, vector<128x8xbf16>, vector<256x8xf32> -> vector<256x8xf32>
    %cst_3 = arith.constant 0.000000e+00 : f32
    %3 = vector.broadcast %cst_3 : f32 to vector<256x8xf32>
    %4 = arith.maximumf %2, %3 : vector<256x8xf32>
    %5 = arith.truncf %4 : vector<256x8xf32> to vector<256x8xbf16>
    %c0_4 = arith.constant 0 : index
    %c0_5 = arith.constant 0 : index
    %6 = vector.load %arg3[%c0_4, %c0_5] : memref<8x128xbf16, #tpu.memory_space<vmem>>, vector<8x128xbf16>
    %cst_6 = arith.constant dense<0.000000e+00> : vector<256x128xf32>
    %7 = tpu.matmul %5, %6, %cst_6 {dimension_numbers = #tpu.dot_dimension_numbers<[1], [0], [0], [1], [0, 0, 1, 1], [], []>} : vector<256x8xbf16>, vector<8x128xbf16>, vector<256x128xf32> -> vector<256x128xf32>
    %cst_7 = arith.constant 0.000000e+00 : f32
    %8 = vector.broadcast %cst_7 : f32 to vector<256x128xf32>
    %9 = arith.subf %8, %7 : vector<256x128xf32>
    %10 = math.exp %9 : vector<256x128xf32>
    %cst_8 = arith.constant 1.000000e+00 : f32
    %11 = vector.broadcast %cst_8 : f32 to vector<256x128xf32>
    %12 = arith.addf %11, %10 : vector<256x128xf32>
    %cst_9 = arith.constant 1.000000e+00 : f32
    %13 = vector.broadcast %cst_9 : f32 to vector<256x128xf32>
    %14 = arith.divf %13, %12 : vector<256x128xf32>
    %c0_10 = arith.constant 0 : index
    %c0_11 = arith.constant 0 : index
    %15 = vector.load %arg4[%c0_10, %c0_11] : memref<256x128xf32, #tpu.memory_space<vmem>>, vector<256x128xf32>
    tpu.vector_store %arg4[%c0_10, %c0_11], %14 {strides = array<i32>} : memref<256x128xf32, #tpu.memory_space<vmem>>, vector<256x128xf32>,
    return
  }
  func.func @transform_0(%arg0: i32) -> (i32, i32) {
    %c0_i32 = arith.constant 0 : i32
    %c0_i32_0 = arith.constant 0 : i32
    return %arg0, %c0_i32 : i32, i32
  }
  func.func @transform_1(%arg0: i32) -> (i32, i32) {
    %c0_i32 = arith.constant 0 : i32
    %c0_i32_0 = arith.constant 0 : i32
    %c0_i32_1 = arith.constant 0 : i32
    return %c0_i32, %c0_i32_0 : i32, i32
  }
  func.func @transform_2(%arg0: i32) -> (i32, i32) {
    %c0_i32 = arith.constant 0 : i32
    %c0_i32_0 = arith.constant 0 : i32
    %c0_i32_1 = arith.constant 0 : i32
    return %c0_i32, %c0_i32_0 : i32, i32
  }
  func.func @transform_3(%arg0: i32) -> (i32, i32) {
    %c0_i32 = arith.constant 0 : i32
    %c0_i32_0 = arith.constant 0 : i32
    return %arg0, %c0_i32 : i32, i32
  }
}

</mosaic_0001>

<llo_original>
// kernel: channel_attention.1
$region0: #{channel_attention.1}
  #allocation0 [shape = 'u32[]', space=smem, size = 0x4, offset = 0x4, fixed_abs, tag = 'smem constant byte address 0x4 - core index']
  #allocation1 [shape = 'u32[144,128]{1,0:T(1,128)}', space=vmem, size = 0x12000, scoped, tag = 'internal scratch']
  %s0 = inlined_call_operand.vmem [shape: bf16[512,128], index: 0, kind: input, shape index: {}]
  %s1 = inlined_call_operand.vmem [shape: bf16[128,8], index: 1, kind: input, shape index: {}]
  %s2 = inlined_call_operand.vmem [shape: bf16[8,128], index: 2, kind: input, shape index: {}]
  %s3 = inlined_call_operand.hbm [shape: f32[512,128], index: 3, kind: output, shape index: {}]
  %s4 = sld [smem:[#allocation0]]
  $region45: #{channel_attention.1} parent=0
    _
  %s6 = ssub.s32 1, %s4
  %s7 = scalar_select 0, %s6, %s4
  $region1: #{channel_attention.1} parent=0
    #allocation2 [shape = 'u8[262144]{0}', space=vmem, size = 0x40000, scoped, tag = 'output window, operand 0']
    #allocation3 [shape = 's32[2]{0}', space=sflag, size = 0x8, scoped, tag = 'scoped memory for channel_attention.1']
    %8 = vsyncpa [#allocation3], 0
    %s9 = scalar_lea.sflag [#allocation3], 1
    %10 = vsyncpa %s9, 0
    loop: start=0, step=1, limit=4
    $region2: #{channel_attention.1} parent=1 // loop_pre_header
      _
    $region3: #{channel_attention.1} parent=1 // loop_header
      %s12 = sphi 0, %s16
      %p13 = scmp.ge.s32.totalorder %s12, 4
      %s22 = sphi 0, %s24
      %s25 = sphi 0, %s22
      %s26 = sphi 0, %s25
      %s42 = sphi 0, %s26
      %s46 = sphi 0, %s46
      %s48 = sphi 0, %s46
      %s49 = sphi 0, %s48
      %s63 = sphi 0, %s49
      %s67 = sphi 0, %s67
      %s69 = sphi 0, %s67
      %s70 = sphi 0, %s69
      %s84 = sphi 0, %s70
      %s90 = sphi 0, %s92
      %s93 = sphi 0, %s90
      %s94 = sphi 0, %s93
      %s110 = sphi 0, %s94
    $region4: #{channel_attention.1} parent=1 // loop_header_branch
      %15 = sbr.rel (%p13) target = $region8
    $region5: #{channel_attention.1} parent=1 // loop_body
      %s17 = ssub.s32 %s12, 1
      %s18 = ssub.s32 %s12, 2
      %s19 = sadd.s32 %s12, 1
      %s20 = ssub.s32 %s12, %s19
      %p21 = scmp.eq.s32.totalorder %s20, 0
      %s23 = sadd.s32 %s22, 1
      %s24 = scalar_select %p21, %s22, %s23
      %p27 = pneg %p21
      %p28 = scmp.eq.s32.totalorder %s12, 1
      %p29 = por %p27, %p28
      %p30 = scmp.ne.s32.totalorder %s22, %s25
      %p31 = scmp.eq.s32.totalorder %s12, 0
      %p32 = por %p30, %p31
      %p33 = scmp.ne.s32.totalorder %s22, %s25
      %p34 = scmp.eq.s32.totalorder %s17, 1
      %p35 = por %p33, %p34
      %p36 = scmp.ne.s32.totalorder %s25, %s26
      %p37 = scmp.eq.s32.totalorder %s17, 0
      %p38 = por %p36, %p37
      %p39 = scmp.ne.s32.totalorder %s25, %s26
      %p40 = scmp.eq.s32.totalorder %s18, 1
      %p41 = por %p39, %p40
      %p43 = scmp.ne.s32.totalorder %s26, %s42
      %p44 = scmp.eq.s32.totalorder %s18, 0
      %p45 = por %p43, %p44
      %s47 = sadd.s32 %s46, 1
      %p50 = scmp.eq.s32.totalorder %s12, 1
      %p51 = scmp.ne.s32.totalorder %s46, %s48
      %p52 = scmp.eq.s32.totalorder %s12, 0
      %p53 = por %p51, %p52
      %p54 = scmp.ne.s32.totalorder %s46, %s48
      %p55 = scmp.eq.s32.totalorder %s17, 1
      %p56 = por %p54, %p55
      %p57 = scmp.ne.s32.totalorder %s48, %s49
      %p58 = scmp.eq.s32.totalorder %s17, 0
      %p59 = por %p57, %p58
      %p60 = scmp.ne.s32.totalorder %s48, %s49
      %p61 = scmp.eq.s32.totalorder %s18, 1
      %p62 = por %p60, %p61
      %p64 = scmp.ne.s32.totalorder %s49, %s63
      %p65 = scmp.eq.s32.totalorder %s18, 0
      %p66 = por %p64, %p65
      %s68 = sadd.s32 %s67, 1
      %p71 = scmp.eq.s32.totalorder %s12, 1
      %p72 = scmp.ne.s32.totalorder %s67, %s69
      %p73 = scmp.eq.s32.totalorder %s12, 0
      %p74 = por %p72, %p73
      %p75 = scmp.ne.s32.totalorder %s67, %s69
      %p76 = scmp.eq.s32.totalorder %s17, 1
      %p77 = por %p75, %p76
      %p78 = scmp.ne.s32.totalorder %s69, %s70
      %p79 = scmp.eq.s32.totalorder %s17, 0
      %p80 = por %p78, %p79
      %p81 = scmp.ne.s32.totalorder %s69, %s70
      %p82 = scmp.eq.s32.totalorder %s18, 1
      %p83 = por %p81, %p82
      %p85 = scmp.ne.s32.totalorder %s70, %s84
      %p86 = scmp.eq.s32.totalorder %s18, 0
      %p87 = por %p85, %p86
      %s88 = ssub.s32 %s12, %s19
      %p89 = scmp.eq.s32.totalorder %s88, 0
      %s91 = sadd.s32 %s90, 1
      %s92 = scalar_select %p89, %s90, %s91
      %p95 = pneg %p89
      %p96 = scmp.eq.s32.totalorder %s12, 1
      %p97 = por %p95, %p96
      %p98 = scmp.ne.s32.totalorder %s90, %s93
      %p99 = scmp.eq.s32.totalorder %s12, 0
      %p100 = por %p98, %p99
      %p101 = scmp.ne.s32.totalorder %s90, %s93
      %p102 = scmp.eq.s32.totalorder %s17, 1
      %p103 = por %p101, %p102
      %p104 = scmp.ne.s32.totalorder %s93, %s94
      %p105 = scmp.eq.s32.totalorder %s17, 0
      %p106 = por %p104, %p105
      %p107 = scmp.ne.s32.totalorder %s93, %s94
      %p108 = scmp.eq.s32.totalorder %s18, 1
      %p109 = por %p107, %p108
      %p111 = scmp.ne.s32.totalorder %s94, %s110
      %p112 = scmp.eq.s32.totalorder %s18, 0
      %p113 = por %p111, %p112
      %p114 = scmp.le.s32.totalorder 1, %s12
      %p115 = scmp.lt.s32.totalorder %s12, 3
      %p116 = pnand %p114, %p115
      %p117 = pneg %p116
      // Predicated region
      $region9: #{channel_attention.1} parent=5 // pred_check
        _
      $region10: #{channel_attention.1} parent=5 // pred_check_branch
        %119 = sbr.rel (%p116) target = $region12
      $region11: #{channel_attention.1} parent=5 // pred_region
        %s120 = ssub.s32 %s12, 1
        // Predicated region
        $region13: #{channel_attention.1} parent=11 // pred_check
          %p121 = pneg %p59
        $region14: #{channel_attention.1} parent=11 // pred_check_branch
          %123 = sbr.rel (%p121) target = $region16
        $region15: #{channel_attention.1} parent=11 // pred_region
          _
        $region16: #{channel_attention.1} parent=11 // pred_fallthru
          _
        // Predicated region
        $region17: #{channel_attention.1} parent=11 // pred_check
          %p124 = pneg %p80
        $region18: #{channel_attention.1} parent=11 // pred_check_branch
          %126 = sbr.rel (%p124) target = $region20
        $region19: #{channel_attention.1} parent=11 // pred_region
          _
        $region20: #{channel_attention.1} parent=11 // pred_fallthru
          _
      $region12: #{channel_attention.1} parent=5 // pred_fallthru
        _
      %p127 = scmp.lt.s32.totalorder %s12, 2
      // Predicated region
      $region21: #{channel_attention.1} parent=5 // pred_check
        %p128 = pneg %p127
      $region22: #{channel_attention.1} parent=5 // pred_check_branch
        %130 = sbr.rel (%p128) target = $region24
      $region23: #{channel_attention.1} parent=5 // pred_region
        // Predicated region
        $region25: #{channel_attention.1} parent=23 // pred_check
          %p131 = pneg %p32
        $region26: #{channel_attention.1} parent=23 // pred_check_branch
          %133 = sbr.rel (%p131) target = $region28
        $region27: #{channel_attention.1} parent=23 // pred_region
          %s134 = smul.u32 32, %s12
          %p135 = scmp.lt.s32.totalorder %s134, 63
          %s136 = scalar_select %p135, %s134, 63
          %s137 = smul.addr %s136, 4
          %s138 = scalar_lea.vmem %s0, %s137
          %s139 = smul.u32 32, %s12
        $region28: #{channel_attention.1} parent=23 // pred_fallthru
          _
      $region24: #{channel_attention.1} parent=5 // pred_fallthru
        _
      %p140 = scmp.le.s32.totalorder 1, %s12
      %p141 = scmp.lt.s32.totalorder %s12, 3
      %p142 = pnand %p140, %p141
      %p143 = pneg %p142
      // Predicated region
      $region29: #{channel_attention.1} parent=5 // pred_check
        _
      $region30: #{channel_attention.1} parent=5 // pred_check_branch
        %145 = sbr.rel (%p142) target = $region32
      $region31: #{channel_attention.1} parent=5 // pred_region
        %s146 = ssub.s32 %s12, 1
        %s147 = smul.u32 32, %s17
        %p148 = scmp.lt.s32.totalorder %s147, 63
        %s149 = scalar_select %p148, %s147, 63
        %s150 = smul.addr %s149, 4
        %s151 = scalar_lea.vmem %s0, %s150
        %p152 = pneg %p38
        %p153 = pneg %p35
        %p154 = pneg %p59
        %p155 = pneg %p56
        %p156 = pneg %p80
        %p157 = pneg %p77
        %p158 = pneg %p106
        %p159 = pneg %p103
        %s160 = sand.u32 %s93, 1
        %s161 = scalar_lea.sflag [#allocation3], %s160
        %s162 = sand.u32 %s93, 1
        %s163 = smul.addr %s162, 256
        %s164 = scalar_lea.vmem [#allocation2], %s163
        %s165 = smul.u32 32, %s17
        %p166 = scmp.lt.s32.totalorder %s165, 63
        %s167 = scalar_select %p166, %s165, 63
        %s168 = smul.addr %s167, 4
        %s169 = scalar_lea.vmem %s0, %s168
        %s170 = smul.u32 32, %s17
        %s171 = smul.u32 32, %s17
        %v173 = vld [vmem:[%s169] sm:$0xf]
        %v174 = vld [vmem:[%s169 + $0x4] sm:$0xf]
        %v175 = vld [vmem:[%s169 + $0x8] sm:$0xf]
        %v176 = vld [vmem:[%s169 + $0xc] sm:$0xf]
        %v177 = vld [vmem:[%s169 + $0x10] sm:$0xf]
        %v178 = vld [vmem:[%s169 + $0x14] sm:$0xf]
        %v179 = vld [vmem:[%s169 + $0x18] sm:$0xf]
        %v180 = vld [vmem:[%s169 + $0x1c] sm:$0xf]
        %v181 = vld [vmem:[%s169 + $0x20] sm:$0xf]
        %v182 = vld [vmem:[%s169 + $0x24] sm:$0xf]
        %v183 = vld [vmem:[%s169 + $0x28] sm:$0xf]
        %v184 = vld [vmem:[%s169 + $0x2c] sm:$0xf]
        %v185 = vld [vmem:[%s169 + $0x30] sm:$0xf]
        %v186 = vld [vmem:[%s169 + $0x34] sm:$0xf]
        %v187 = vld [vmem:[%s169 + $0x38] sm:$0xf]
        %v188 = vld [vmem:[%s169 + $0x3c] sm:$0xf]
        %v189 = vld [vmem:[%s169 + $0x40] sm:$0xf]
        %v190 = vld [vmem:[%s169 + $0x44] sm:$0xf]
        %v191 = vld [vmem:[%s169 + $0x48] sm:$0xf]
        %v192 = vld [vmem:[%s169 + $0x4c] sm:$0xf]
        %v193 = vld [vmem:[%s169 + $0x50] sm:$0xf]
        %v194 = vld [vmem:[%s169 + $0x54] sm:$0xf]
        %v195 = vld [vmem:[%s169 + $0x58] sm:$0xf]
        %v196 = vld [vmem:[%s169 + $0x5c] sm:$0xf]
        %v197 = vld [vmem:[%s169 + $0x60] sm:$0xf]
        %v198 = vld [vmem:[%s169 + $0x64] sm:$0xf]
        %v199 = vld [vmem:[%s169 + $0x68] sm:$0xf]
        %v200 = vld [vmem:[%s169 + $0x6c] sm:$0xf]
        %v201 = vld [vmem:[%s169 + $0x70] sm:$0xf]
        %v202 = vld [vmem:[%s169 + $0x74] sm:$0xf]
        %v203 = vld [vmem:[%s169 + $0x78] sm:$0xf]
        %v204 = vld [vmem:[%s169 + $0x7c] sm:$0xf]
        %v205 = vld [vmem:[%s1] sm:$0xf]
        %v206 = vld [vmem:[%s1 + $0x4] sm:$0xf]
        %v207 = vld [vmem:[%s1 + $0x8] sm:$0xf]
        %v208 = vld [vmem:[%s1 + $0xc] sm:$0xf]
        %v209 = vld [vmem:[%s1 + $0x10] sm:$0xf]
        %v210 = vld [vmem:[%s1 + $0x14] sm:$0xf]
        %v211 = vld [vmem:[%s1 + $0x18] sm:$0xf]
        %v212 = vld [vmem:[%s1 + $0x1c] sm:$0xf]
        %v213 = vld [vmem:[%s1 + $0x20] sm:$0xf]
        %v214 = vld [vmem:[%s1 + $0x24] sm:$0xf]
        %v215 = vld [vmem:[%s1 + $0x28] sm:$0xf]
        %v216 = vld [vmem:[%s1 + $0x2c] sm:$0xf]
        %v217 = vld [vmem:[%s1 + $0x30] sm:$0xf]
        %v218 = vld [vmem:[%s1 + $0x34] sm:$0xf]
        %v219 = vld [vmem:[%s1 + $0x38] sm:$0xf]
        %v220 = vld [vmem:[%s1 + $0x3c] sm:$0xf]
        %v253 = vunpack.c.l.b16 %v173
        %v254 = vunpack.c.l.b16 %v174
        %v255 = vunpack.c.l.b16 %v175
        %v256 = vunpack.c.l.b16 %v176
        %v257 = vunpack.c.l.b16 %v177
        %v258 = vunpack.c.l.b16 %v178
        %v259 = vunpack.c.l.b16 %v179
        %v260 = vunpack.c.l.b16 %v180
        %v261 = vunpack.c.l.b16 %v181
        %v262 = vunpack.c.l.b16 %v182
        %v263 = vunpack.c.l.b16 %v183
        %v264 = vunpack.c.l.b16 %v184
        %v265 = vunpack.c.l.b16 %v185
        %v266 = vunpack.c.l.b16 %v186
        %v267 = vunpack.c.l.b16 %v187
        %v268 = vunpack.c.l.b16 %v188
        %v269 = vunpack.c.l.b16 %v189
        %v270 = vunpack.c.l.b16 %v190
        %v271 = vunpack.c.l.b16 %v191
        %v272 = vunpack.c.l.b16 %v192
        %v273 = vunpack.c.l.b16 %v193
        %v274 = vunpack.c.l.b16 %v194
        %v275 = vunpack.c.l.b16 %v195
        %v276 = vunpack.c.l.b16 %v196
        %v277 = vunpack.c.l.b16 %v197
        %v278 = vunpack.c.l.b16 %v198
        %v279 = vunpack.c.l.b16 %v199
        %v280 = vunpack.c.l.b16 %v200
        %v281 = vunpack.c.l.b16 %v201
        %v282 = vunpack.c.l.b16 %v202
        %v283 = vunpack.c.l.b16 %v203
        %v284 = vunpack.c.l.b16 %v204
        %v285 = vpack.c.b16 %v254, %v253
        %v286 = vpack.c.b16 %v256, %v255
        %v287 = vpack.c.b16 %v258, %v257
        %v288 = vpack.c.b16 %v260, %v259
        %v289 = vpack.c.b16 %v262, %v261
        %v290 = vpack.c.b16 %v264, %v263
        %v291 = vpack.c.b16 %v266, %v265
        %v292 = vpack.c.b16 %v268, %v267
        %v293 = vpack.c.b16 %v270, %v269
        %v294 = vpack.c.b16 %v272, %v271
        %v295 = vpack.c.b16 %v274, %v273
        %v296 = vpack.c.b16 %v276, %v275
        %v297 = vpack.c.b16 %v278, %v277
        %v298 = vpack.c.b16 %v280, %v279
        %v299 = vpack.c.b16 %v282, %v281
        %v300 = vpack.c.b16 %v284, %v283
        %v333 = vunpack.c.l.b16 %v205
        %v334 = vunpack.c.l.b16 %v206
        %v335 = vunpack.c.l.b16 %v207
        %v336 = vunpack.c.l.b16 %v208
        %v337 = vunpack.c.l.b16 %v209
        %v338 = vunpack.c.l.b16 %v210
        %v339 = vunpack.c.l.b16 %v211
        %v340 = vunpack.c.l.b16 %v212
        %v341 = vunpack.c.l.b16 %v213
        %v342 = vunpack.c.l.b16 %v214
        %v343 = vunpack.c.l.b16 %v215
        %v344 = vunpack.c.l.b16 %v216
        %v345 = vunpack.c.l.b16 %v217
        %v346 = vunpack.c.l.b16 %v218
        %v347 = vunpack.c.l.b16 %v219
        %v348 = vunpack.c.l.b16 %v220
        %v349 = vpack.c.b16 %v334, %v333
        %v350 = vpack.c.b16 %v336, %v335
        %v351 = vpack.c.b16 %v338, %v337
        %v352 = vpack.c.b16 %v340, %v339
        %v353 = vpack.c.b16 %v342, %v341
        %v354 = vpack.c.b16 %v344, %v343
        %v355 = vpack.c.b16 %v346, %v345
        %v356 = vpack.c.b16 %v348, %v347
        %365 = vmatprep.subr.bf16.mxu0 0
        %366 = vmatpush1.bf16.msra.mxu0 %v356
        %367 = vmatprep.subr.bf16.mxu0 0
        %368 = vmatpush1.bf16.msra.mxu0 %v355
        %369 = vmatprep.subr.bf16.mxu0 0
        %370 = vmatpush1.bf16.msra.mxu0 %v354
        %371 = vmatprep.subr.bf16.mxu0 0
        %372 = vmatpush1.bf16.msra.mxu0 %v353
        %373 = vmatprep.subr.bf16.mxu0 0
        %374 = vmatpush1.bf16.msra.mxu0 %v352
        %375 = vmatprep.subr.bf16.mxu0 0
        %376 = vmatpush1.bf16.msra.mxu0 %v351
        %377 = vmatprep.subr.bf16.mxu0 0
        %378 = vmatpush1.bf16.msra.mxu0 %v350
        %379 = vmatprep.subr.bf16.mxu0 0
        %380 = vmatpush1.bf16.msra.mxu0 %v349
        %381 = vmatprep.subr.bf16.mxu0 0
        %382 = vmatpush2.bf16.msra.mxu0 0
        %383 = vmatprep.subr.bf16.mxu0 0
        %384 = vmatpush2.bf16.msra.mxu0 0
        %385 = vmatprep.subr.bf16.mxu0 0
        %386 = vmatpush2.bf16.msra.mxu0 0
        %387 = vmatprep.subr.bf16.mxu0 0
        %388 = vmatpush2.bf16.msra.mxu0 0
        %389 = vmatprep.subr.bf16.mxu0 0
        %390 = vmatpush2.bf16.msra.mxu0 0
        %391 = vmatprep.subr.bf16.mxu0 0
        %392 = vmatpush2.bf16.msra.mxu0 0
        %393 = vmatprep.subr.bf16.mxu0 0
        %394 = vmatpush2.bf16.msra.mxu0 0
        %395 = vmatprep.subr.bf16.mxu0 0
        %396 = vmatpush2.bf16.msra.mxu0 0
        %397 = vmatprep.mubr.bf16.mxu0 0
        %398 = vmatmul.mubr.bf16.gmra.mxu0 %v285
        %v399 = vpop.f32.mrf.mxu0
        %v400 = vadd.f32 0.0, %v399
        %v401 = vpop.f32.mrf.mxu0
        %v402 = vpop.f32.mrf.mxu0
        %v403 = vadd.f32 0.0, %v402
        %v404 = vpop.f32.mrf.mxu0
        %405 = vmatprep.mubr.bf16.mxu0 0
        %406 = vmatmul.mubr.bf16.gmra.mxu0 %v286
        %v407 = vpop.f32.mrf.mxu0
        %v408 = vadd.f32 0.0, %v407
        %v409 = vpop.f32.mrf.mxu0
        %v410 = vpop.f32.mrf.mxu0
        %v411 = vadd.f32 0.0, %v410
        %v412 = vpop.f32.mrf.mxu0
        %413 = vmatprep.mubr.bf16.mxu0 0
        %414 = vmatmul.mubr.bf16.gmra.mxu0 %v287
        %v415 = vpop.f32.mrf.mxu0
        %v416 = vadd.f32 0.0, %v415
        %v417 = vpop.f32.mrf.mxu0
        %v418 = vpop.f32.mrf.mxu0
        %v419 = vadd.f32 0.0, %v418
        %v420 = vpop.f32.mrf.mxu0
        %421 = vmatprep.mubr.bf16.mxu0 0
        %422 = vmatmul.mubr.bf16.gmra.mxu0 %v288
        %v423 = vpop.f32.mrf.mxu0
        %v424 = vadd.f32 0.0, %v423
        %v425 = vpop.f32.mrf.mxu0
        %v426 = vpop.f32.mrf.mxu0
        %v427 = vadd.f32 0.0, %v426
        %v428 = vpop.f32.mrf.mxu0
        %429 = vmatprep.mubr.bf16.mxu0 0
        %430 = vmatmul.mubr.bf16.gmra.mxu0 %v289
        %v431 = vpop.f32.mrf.mxu0
        %v432 = vadd.f32 0.0, %v431
        %v433 = vpop.f32.mrf.mxu0
        %v434 = vpop.f32.mrf.mxu0
        %v435 = vadd.f32 0.0, %v434
        %v436 = vpop.f32.mrf.mxu0
        %437 = vmatprep.mubr.bf16.mxu0 0
        %438 = vmatmul.mubr.bf16.gmra.mxu0 %v290
        %v439 = vpop.f32.mrf.mxu0
        %v440 = vadd.f32 0.0, %v439
        %v441 = vpop.f32.mrf.mxu0
        %v442 = vpop.f32.mrf.mxu0
        %v443 = vadd.f32 0.0, %v442
        %v444 = vpop.f32.mrf.mxu0
        %445 = vmatprep.mubr.bf16.mxu0 0
        %446 = vmatmul.mubr.bf16.gmra.mxu0 %v291
        %v447 = vpop.f32.mrf.mxu0
        %v448 = vadd.f32 0.0, %v447
        %v449 = vpop.f32.mrf.mxu0
        %v450 = vpop.f32.mrf.mxu0
        %v451 = vadd.f32 0.0, %v450
        %v452 = vpop.f32.mrf.mxu0
        %453 = vmatprep.mubr.bf16.mxu0 0
        %454 = vmatmul.mubr.bf16.gmra.mxu0 %v292
        %v455 = vpop.f32.mrf.mxu0
        %v456 = vadd.f32 0.0, %v455
        %v457 = vpop.f32.mrf.mxu0
        %v458 = vpop.f32.mrf.mxu0
        %v459 = vadd.f32 0.0, %v458
        %v460 = vpop.f32.mrf.mxu0
        %461 = vmatprep.mubr.bf16.mxu0 0
        %462 = vmatmul.mubr.bf16.gmra.mxu0 %v293
        %v463 = vpop.f32.mrf.mxu0
        %v464 = vadd.f32 0.0, %v463
        %v465 = vpop.f32.mrf.mxu0
        %v466 = vpop.f32.mrf.mxu0
        %v467 = vadd.f32 0.0, %v466
        %v468 = vpop.f32.mrf.mxu0
        %469 = vmatprep.mubr.bf16.mxu0 0
        %470 = vmatmul.mubr.bf16.gmra.mxu0 %v294
        %v471 = vpop.f32.mrf.mxu0
        %v472 = vadd.f32 0.0, %v471
        %v473 = vpop.f32.mrf.mxu0
        %v474 = vpop.f32.mrf.mxu0
        %v475 = vadd.f32 0.0, %v474
        %v476 = vpop.f32.mrf.mxu0
        %477 = vmatprep.mubr.bf16.mxu0 0
        %478 = vmatmul.mubr.bf16.gmra.mxu0 %v295
        %v479 = vpop.f32.mrf.mxu0
        %v480 = vadd.f32 0.0, %v479
        %v481 = vpop.f32.mrf.mxu0
        %v482 = vpop.f32.mrf.mxu0
        %v483 = vadd.f32 0.0, %v482
        %v484 = vpop.f32.mrf.mxu0
        %485 = vmatprep.mubr.bf16.mxu0 0
        %486 = vmatmul.mubr.bf16.gmra.mxu0 %v296
        %v487 = vpop.f32.mrf.mxu0
        %v488 = vadd.f32 0.0, %v487
        %v489 = vpop.f32.mrf.mxu0
        %v490 = vpop.f32.mrf.mxu0
        %v491 = vadd.f32 0.0, %v490
        %v492 = vpop.f32.mrf.mxu0
        %493 = vmatprep.mubr.bf16.mxu0 0
        %494 = vmatmul.mubr.bf16.gmra.mxu0 %v297
        %v495 = vpop.f32.mrf.mxu0
        %v496 = vadd.f32 0.0, %v495
        %v497 = vpop.f32.mrf.mxu0
        %v498 = vpop.f32.mrf.mxu0
        %v499 = vadd.f32 0.0, %v498
        %v500 = vpop.f32.mrf.mxu0
        %501 = vmatprep.mubr.bf16.mxu0 0
        %502 = vmatmul.mubr.bf16.gmra.mxu0 %v298
        %v503 = vpop.f32.mrf.mxu0
        %v504 = vadd.f32 0.0, %v503
        %v505 = vpop.f32.mrf.mxu0
        %v506 = vpop.f32.mrf.mxu0
        %v507 = vadd.f32 0.0, %v506
        %v508 = vpop.f32.mrf.mxu0
        %509 = vmatprep.mubr.bf16.mxu0 0
        %510 = vmatmul.mubr.bf16.gmra.mxu0 %v299
        %v511 = vpop.f32.mrf.mxu0
        %v512 = vadd.f32 0.0, %v511
        %v513 = vpop.f32.mrf.mxu0
        %v514 = vpop.f32.mrf.mxu0
        %v515 = vadd.f32 0.0, %v514
        %v516 = vpop.f32.mrf.mxu0
        %517 = vmatprep.mubr.bf16.mxu0 0
        %518 = vmatmul.mubr.bf16.gmra.mxu0 %v300
        %v519 = vpop.f32.mrf.mxu0
        %v520 = vadd.f32 0.0, %v519
        %v521 = vpop.f32.mrf.mxu0
        %v522 = vpop.f32.mrf.mxu0
        %v523 = vadd.f32 0.0, %v522
        %v524 = vpop.f32.mrf.mxu0
        %525 = vdwg.mxu0
        %v526 = vmax.f32 %v400, 0.0
        %v527 = vmax.f32 %v403, 0.0
        %v528 = vmax.f32 %v408, 0.0
        %v529 = vmax.f32 %v411, 0.0
        %v530 = vmax.f32 %v416, 0.0
        %v531 = vmax.f32 %v419, 0.0
        %v532 = vmax.f32 %v424, 0.0
        %v533 = vmax.f32 %v427, 0.0
        %v534 = vmax.f32 %v432, 0.0
        %v535 = vmax.f32 %v435, 0.0
        %v536 = vmax.f32 %v440, 0.0
        %v537 = vmax.f32 %v443, 0.0
        %v538 = vmax.f32 %v448, 0.0
        %v539 = vmax.f32 %v451, 0.0
        %v540 = vmax.f32 %v456, 0.0
        %v541 = vmax.f32 %v459, 0.0
        %v542 = vmax.f32 %v464, 0.0
        %v543 = vmax.f32 %v467, 0.0
        %v544 = vmax.f32 %v472, 0.0
        %v545 = vmax.f32 %v475, 0.0
        %v546 = vmax.f32 %v480, 0.0
        %v547 = vmax.f32 %v483, 0.0
        %v548 = vmax.f32 %v488, 0.0
        %v549 = vmax.f32 %v491, 0.0
        %v550 = vmax.f32 %v496, 0.0
        %v551 = vmax.f32 %v499, 0.0
        %v552 = vmax.f32 %v504, 0.0
        %v553 = vmax.f32 %v507, 0.0
        %v554 = vmax.f32 %v512, 0.0
        %v555 = vmax.f32 %v515, 0.0
        %v556 = vmax.f32 %v520, 0.0
        %v557 = vmax.f32 %v523, 0.0
        %v558 = vpack.c.bf16 %v527, %v526
        %v559 = vpack.c.bf16 %v529, %v528
        %v560 = vpack.c.bf16 %v531, %v530
        %v561 = vpack.c.bf16 %v533, %v532
        %v562 = vpack.c.bf16 %v535, %v534
        %v563 = vpack.c.bf16 %v537, %v536
        %v564 = vpack.c.bf16 %v539, %v538
        %v565 = vpack.c.bf16 %v541, %v540
        %v566 = vpack.c.bf16 %v543, %v542
        %v567 = vpack.c.bf16 %v545, %v544
        %v568 = vpack.c.bf16 %v547, %v546
        %v569 = vpack.c.bf16 %v549, %v548
        %v570 = vpack.c.bf16 %v551, %v550
        %v571 = vpack.c.bf16 %v553, %v552
        %v572 = vpack.c.bf16 %v555, %v554
        %v573 = vpack.c.bf16 %v557, %v556
        %v574 = vld [vmem:[%s2] sm:$0xf]
        %vm575 = vcmask 64512
        %v577 = vsel %vm575, %v558, 0
        %v580 = vsel %vm575, %v559, 0
        %v583 = vsel %vm575, %v560, 0
        %v586 = vsel %vm575, %v561, 0
        %v589 = vsel %vm575, %v562, 0
        %v592 = vsel %vm575, %v563, 0
        %v595 = vsel %vm575, %v564, 0
        %v598 = vsel %vm575, %v565, 0
        %v601 = vsel %vm575, %v566, 0
        %v604 = vsel %vm575, %v567, 0
        %v607 = vsel %vm575, %v568, 0
        %v610 = vsel %vm575, %v569, 0
        %v613 = vsel %vm575, %v570, 0
        %v616 = vsel %vm575, %v571, 0
        %v619 = vsel %vm575, %v572, 0
        %v622 = vsel %vm575, %v573, 0
        %vm624 = vcmask 1043456
        %v626 = vsel %vm624, %v574, 0
        %628 = vmatprep.subr.bf16.mxu0 0
        %629 = vmatpush1.bf16.msra.mxu0 0
        %630 = vmatprep.subr.bf16.mxu0 0
        %631 = vmatpush1.bf16.msra.mxu0 0
        %632 = vmatprep.subr.bf16.mxu0 0
        %633 = vmatpush1.bf16.msra.mxu0 0
        %634 = vmatprep.subr.bf16.mxu0 0
        %635 = vmatpush1.bf16.msra.mxu0 0
        %636 = vmatprep.subr.bf16.mxu0 0
        %637 = vmatpush1.bf16.msra.mxu0 0
        %638 = vmatprep.subr.bf16.mxu0 0
        %639 = vmatpush1.bf16.msra.mxu0 0
        %640 = vmatprep.subr.bf16.mxu0 0
        %641 = vmatpush1.bf16.msra.mxu0 0
        %642 = vmatprep.subr.bf16.mxu0 0
        %643 = vmatpush1.bf16.msra.mxu0 %v626
        %644 = vmatprep.subr.bf16.mxu0 0
        %645 = vmatpush2.bf16.msra.mxu0 0
        %646 = vmatprep.subr.bf16.mxu0 0
        %647 = vmatpush2.bf16.msra.mxu0 0
        %648 = vmatprep.subr.bf16.mxu0 0
        %649 = vmatpush2.bf16.msra.mxu0 0
        %650 = vmatprep.subr.bf16.mxu0 0
        %651 = vmatpush2.bf16.msra.mxu0 0
        %652 = vmatprep.subr.bf16.mxu0 0
        %653 = vmatpush2.bf16.msra.mxu0 0
        %654 = vmatprep.subr.bf16.mxu0 0
        %655 = vmatpush2.bf16.msra.mxu0 0
        %656 = vmatprep.subr.bf16.mxu0 0
        %657 = vmatpush2.bf16.msra.mxu0 0
        %658 = vmatprep.subr.bf16.mxu0 0
        %659 = vmatpush2.bf16.msra.mxu0 0
        %660 = vmatprep.mubr.bf16.mxu0 0
        %661 = vmatmul.mubr.bf16.gmra.mxu0 %v577
        %v662 = vpop.f32.mrf.mxu0
        %v663 = vadd.f32 0.0, %v662
        %v664 = vpop.f32.mrf.mxu0
        %v665 = vpop.f32.mrf.mxu0
        %v666 = vadd.f32 0.0, %v665
        %v667 = vpop.f32.mrf.mxu0
        %668 = vmatprep.mubr.bf16.mxu0 0
        %669 = vmatmul.mubr.bf16.gmra.mxu0 %v580
        %v670 = vpop.f32.mrf.mxu0
        %v671 = vadd.f32 0.0, %v670
        %v672 = vpop.f32.mrf.mxu0
        %v673 = vpop.f32.mrf.mxu0
        %v674 = vadd.f32 0.0, %v673
        %v675 = vpop.f32.mrf.mxu0
        %676 = vmatprep.mubr.bf16.mxu0 0
        %677 = vmatmul.mubr.bf16.gmra.mxu0 %v583
        %v678 = vpop.f32.mrf.mxu0
        %v679 = vadd.f32 0.0, %v678
        %v680 = vpop.f32.mrf.mxu0
        %v681 = vpop.f32.mrf.mxu0
        %v682 = vadd.f32 0.0, %v681
        %v683 = vpop.f32.mrf.mxu0
        %684 = vmatprep.mubr.bf16.mxu0 0
        %685 = vmatmul.mubr.bf16.gmra.mxu0 %v586
        %v686 = vpop.f32.mrf.mxu0
        %v687 = vadd.f32 0.0, %v686
        %v688 = vpop.f32.mrf.mxu0
        %v689 = vpop.f32.mrf.mxu0
        %v690 = vadd.f32 0.0, %v689
        %v691 = vpop.f32.mrf.mxu0
        %692 = vmatprep.mubr.bf16.mxu0 0
        %693 = vmatmul.mubr.bf16.gmra.mxu0 %v589
        %v694 = vpop.f32.mrf.mxu0
        %v695 = vadd.f32 0.0, %v694
        %v696 = vpop.f32.mrf.mxu0
        %v697 = vpop.f32.mrf.mxu0
        %v698 = vadd.f32 0.0, %v697
        %v699 = vpop.f32.mrf.mxu0
        %700 = vmatprep.mubr.bf16.mxu0 0
        %701 = vmatmul.mubr.bf16.gmra.mxu0 %v592
        %v702 = vpop.f32.mrf.mxu0
        %v703 = vadd.f32 0.0, %v702
        %v704 = vpop.f32.mrf.mxu0
        %v705 = vpop.f32.mrf.mxu0
        %v706 = vadd.f32 0.0, %v705
        %v707 = vpop.f32.mrf.mxu0
        %708 = vmatprep.mubr.bf16.mxu0 0
        %709 = vmatmul.mubr.bf16.gmra.mxu0 %v595
        %v710 = vpop.f32.mrf.mxu0
        %v711 = vadd.f32 0.0, %v710
        %v712 = vpop.f32.mrf.mxu0
        %v713 = vpop.f32.mrf.mxu0
        %v714 = vadd.f32 0.0, %v713
        %v715 = vpop.f32.mrf.mxu0
        %716 = vmatprep.mubr.bf16.mxu0 0
        %717 = vmatmul.mubr.bf16.gmra.mxu0 %v598
        %v718 = vpop.f32.mrf.mxu0
        %v719 = vadd.f32 0.0, %v718
        %v720 = vpop.f32.mrf.mxu0
        %v721 = vpop.f32.mrf.mxu0
        %v722 = vadd.f32 0.0, %v721
        %v723 = vpop.f32.mrf.mxu0
        %724 = vmatprep.mubr.bf16.mxu0 0
        %725 = vmatmul.mubr.bf16.gmra.mxu0 %v601
        %v726 = vpop.f32.mrf.mxu0
        %v727 = vadd.f32 0.0, %v726
        %v728 = vpop.f32.mrf.mxu0
        %v729 = vpop.f32.mrf.mxu0
        %v730 = vadd.f32 0.0, %v729
        %v731 = vpop.f32.mrf.mxu0
        %732 = vmatprep.mubr.bf16.mxu0 0
        %733 = vmatmul.mubr.bf16.gmra.mxu0 %v604
        %v734 = vpop.f32.mrf.mxu0
        %v735 = vadd.f32 0.0, %v734
        %v736 = vpop.f32.mrf.mxu0
        %v737 = vpop.f32.mrf.mxu0
        %v738 = vadd.f32 0.0, %v737
        %v739 = vpop.f32.mrf.mxu0
        %740 = vmatprep.mubr.bf16.mxu0 0
        %741 = vmatmul.mubr.bf16.gmra.mxu0 %v607
        %v742 = vpop.f32.mrf.mxu0
        %v743 = vadd.f32 0.0, %v742
        %v744 = vpop.f32.mrf.mxu0
        %v745 = vpop.f32.mrf.mxu0
        %v746 = vadd.f32 0.0, %v745
        %v747 = vpop.f32.mrf.mxu0
        %748 = vmatprep.mubr.bf16.mxu0 0
        %749 = vmatmul.mubr.bf16.gmra.mxu0 %v610
        %v750 = vpop.f32.mrf.mxu0
        %v751 = vadd.f32 0.0, %v750
        %v752 = vpop.f32.mrf.mxu0
        %v753 = vpop.f32.mrf.mxu0
        %v754 = vadd.f32 0.0, %v753
        %v755 = vpop.f32.mrf.mxu0
        %756 = vmatprep.mubr.bf16.mxu0 0
        %757 = vmatmul.mubr.bf16.gmra.mxu0 %v613
        %v758 = vpop.f32.mrf.mxu0
        %v759 = vadd.f32 0.0, %v758
        %v760 = vpop.f32.mrf.mxu0
        %v761 = vpop.f32.mrf.mxu0
        %v762 = vadd.f32 0.0, %v761
        %v763 = vpop.f32.mrf.mxu0
        %764 = vmatprep.mubr.bf16.mxu0 0
        %765 = vmatmul.mubr.bf16.gmra.mxu0 %v616
        %v766 = vpop.f32.mrf.mxu0
        %v767 = vadd.f32 0.0, %v766
        %v768 = vpop.f32.mrf.mxu0
        %v769 = vpop.f32.mrf.mxu0
        %v770 = vadd.f32 0.0, %v769
        %v771 = vpop.f32.mrf.mxu0
        %772 = vmatprep.mubr.bf16.mxu0 0
        %773 = vmatmul.mubr.bf16.gmra.mxu0 %v619
        %v774 = vpop.f32.mrf.mxu0
        %v775 = vadd.f32 0.0, %v774
        %v776 = vpop.f32.mrf.mxu0
        %v777 = vpop.f32.mrf.mxu0
        %v778 = vadd.f32 0.0, %v777
        %v779 = vpop.f32.mrf.mxu0
        %780 = vmatprep.mubr.bf16.mxu0 0
        %781 = vmatmul.mubr.bf16.gmra.mxu0 %v622
        %v782 = vpop.f32.mrf.mxu0
        %v783 = vadd.f32 0.0, %v782
        %v784 = vpop.f32.mrf.mxu0
        %v785 = vpop.f32.mrf.mxu0
        %v786 = vadd.f32 0.0, %v785
        %v787 = vpop.f32.mrf.mxu0
        %788 = vdwg.mxu0
        %v789 = vsub.f32 0.0, %v663
        %v790 = vsub.f32 0.0, %v666
        %v791 = vsub.f32 0.0, %v671
        %v792 = vsub.f32 0.0, %v674
        %v793 = vsub.f32 0.0, %v679
        %v794 = vsub.f32 0.0, %v682
        %v795 = vsub.f32 0.0, %v687
        %v796 = vsub.f32 0.0, %v690
        %v797 = vsub.f32 0.0, %v695
        %v798 = vsub.f32 0.0, %v698
        %v799 = vsub.f32 0.0, %v703
        %v800 = vsub.f32 0.0, %v706
        %v801 = vsub.f32 0.0, %v711
        %v802 = vsub.f32 0.0, %v714
        %v803 = vsub.f32 0.0, %v719
        %v804 = vsub.f32 0.0, %v722
        %v805 = vsub.f32 0.0, %v727
        %v806 = vsub.f32 0.0, %v730
        %v807 = vsub.f32 0.0, %v735
        %v808 = vsub.f32 0.0, %v738
        %v809 = vsub.f32 0.0, %v743
        %v810 = vsub.f32 0.0, %v746
        %v811 = vsub.f32 0.0, %v751
        %v812 = vsub.f32 0.0, %v754
        %v813 = vsub.f32 0.0, %v759
        %v814 = vsub.f32 0.0, %v762
        %v815 = vsub.f32 0.0, %v767
        %v816 = vsub.f32 0.0, %v770
        %v817 = vsub.f32 0.0, %v775
        %v818 = vsub.f32 0.0, %v778
        %v819 = vsub.f32 0.0, %v783
        %v820 = vsub.f32 0.0, %v786
        %v821 = vmul.f32 %v789, 1.442695
        %v822 = vpow.pop %v821
        %v823 = vmul.f32 %v790, 1.442695
        %v824 = vpow.pop %v823
        %v825 = vmul.f32 %v791, 1.442695
        %v826 = vpow.pop %v825
        %v827 = vmul.f32 %v792, 1.442695
        %v828 = vpow.pop %v827
        %v829 = vmul.f32 %v793, 1.442695
        %v830 = vpow.pop %v829
        %v831 = vmul.f32 %v794, 1.442695
        %v832 = vpow.pop %v831
        %v833 = vmul.f32 %v795, 1.442695
        %v834 = vpow.pop %v833
        %v835 = vmul.f32 %v796, 1.442695
        %v836 = vpow.pop %v835
        %v837 = vmul.f32 %v797, 1.442695
        %v838 = vpow.pop %v837
        %v839 = vmul.f32 %v798, 1.442695
        %v840 = vpow.pop %v839
        %v841 = vmul.f32 %v799, 1.442695
        %v842 = vpow.pop %v841
        %v843 = vmul.f32 %v800, 1.442695
        %v844 = vpow.pop %v843
        %v845 = vmul.f32 %v801, 1.442695
        %v846 = vpow.pop %v845
        %v847 = vmul.f32 %v802, 1.442695
        %v848 = vpow.pop %v847
        %v849 = vmul.f32 %v803, 1.442695
        %v850 = vpow.pop %v849
        %v851 = vmul.f32 %v804, 1.442695
        %v852 = vpow.pop %v851
        %v853 = vmul.f32 %v805, 1.442695
        %v854 = vpow.pop %v853
        %v855 = vmul.f32 %v806, 1.442695
        %v856 = vpow.pop %v855
        %v857 = vmul.f32 %v807, 1.442695
        %v858 = vpow.pop %v857
        %v859 = vmul.f32 %v808, 1.442695
        %v860 = vpow.pop %v859
        %v861 = vmul.f32 %v809, 1.442695
        %v862 = vpow.pop %v861
        %v863 = vmul.f32 %v810, 1.442695
        %v864 = vpow.pop %v863
        %v865 = vmul.f32 %v811, 1.442695
        %v866 = vpow.pop %v865
        %v867 = vmul.f32 %v812, 1.442695
        %v868 = vpow.pop %v867
        %v869 = vmul.f32 %v813, 1.442695
        %v870 = vpow.pop %v869
        %v871 = vmul.f32 %v814, 1.442695
        %v872 = vpow.pop %v871
        %v873 = vmul.f32 %v815, 1.442695
        %v874 = vpow.pop %v873
        %v875 = vmul.f32 %v816, 1.442695
        %v876 = vpow.pop %v875
        %v877 = vmul.f32 %v817, 1.442695
        %v878 = vpow.pop %v877
        %v879 = vmul.f32 %v818, 1.442695
        %v880 = vpow.pop %v879
        %v881 = vmul.f32 %v819, 1.442695
        %v882 = vpow.pop %v881
        %v883 = vmul.f32 %v820, 1.442695
        %v884 = vpow.pop %v883
        %v885 = vadd.f32 %v822, 1.0
        %v886 = vadd.f32 %v824, 1.0
        %v887 = vadd.f32 %v826, 1.0
        %v888 = vadd.f32 %v828, 1.0
        %v889 = vadd.f32 %v830, 1.0
        %v890 = vadd.f32 %v832, 1.0
        %v891 = vadd.f32 %v834, 1.0
        %v892 = vadd.f32 %v836, 1.0
        %v893 = vadd.f32 %v838, 1.0
        %v894 = vadd.f32 %v840, 1.0
        %v895 = vadd.f32 %v842, 1.0
        %v896 = vadd.f32 %v844, 1.0
        %v897 = vadd.f32 %v846, 1.0
        %v898 = vadd.f32 %v848, 1.0
        %v899 = vadd.f32 %v850, 1.0
        %v900 = vadd.f32 %v852, 1.0
        %v901 = vadd.f32 %v854, 1.0
        %v902 = vadd.f32 %v856, 1.0
        %v903 = vadd.f32 %v858, 1.0
        %v904 = vadd.f32 %v860, 1.0
        %v905 = vadd.f32 %v862, 1.0
        %v906 = vadd.f32 %v864, 1.0
        %v907 = vadd.f32 %v866, 1.0
        %v908 = vadd.f32 %v868, 1.0
        %v909 = vadd.f32 %v870, 1.0
        %v910 = vadd.f32 %v872, 1.0
        %v911 = vadd.f32 %v874, 1.0
        %v912 = vadd.f32 %v876, 1.0
        %v913 = vadd.f32 %v878, 1.0
        %v914 = vadd.f32 %v880, 1.0
        %v915 = vadd.f32 %v882, 1.0
        %v916 = vadd.f32 %v884, 1.0
        %v917 = vrcp.pop %v885
        %v918 = vmul.f32 1.0, %v917
        %v919 = vrcp.pop %v886
        %v920 = vmul.f32 1.0, %v919
        %v921 = vrcp.pop %v887
        %v922 = vmul.f32 1.0, %v921
        %v923 = vrcp.pop %v888
        %v924 = vmul.f32 1.0, %v923
        %v925 = vrcp.pop %v889
        %v926 = vmul.f32 1.0, %v925
        %v927 = vrcp.pop %v890
        %v928 = vmul.f32 1.0, %v927
        %v929 = vrcp.pop %v891
        %v930 = vmul.f32 1.0, %v929
        %v931 = vrcp.pop %v892
        %v932 = vmul.f32 1.0, %v931
        %v933 = vrcp.pop %v893
        %v934 = vmul.f32 1.0, %v933
        %v935 = vrcp.pop %v894
        %v936 = vmul.f32 1.0, %v935
        %v937 = vrcp.pop %v895
        %v938 = vmul.f32 1.0, %v937
        %v939 = vrcp.pop %v896
        %v940 = vmul.f32 1.0, %v939
        %v941 = vrcp.pop %v897
        %v942 = vmul.f32 1.0, %v941
        %v943 = vrcp.pop %v898
        %v944 = vmul.f32 1.0, %v943
        %v945 = vrcp.pop %v899
        %v946 = vmul.f32 1.0, %v945
        %v947 = vrcp.pop %v900
        %v948 = vmul.f32 1.0, %v947
        %v949 = vrcp.pop %v901
        %v950 = vmul.f32 1.0, %v949
        %v951 = vrcp.pop %v902
        %v952 = vmul.f32 1.0, %v951
        %v953 = vrcp.pop %v903
        %v954 = vmul.f32 1.0, %v953
        %v955 = vrcp.pop %v904
        %v956 = vmul.f32 1.0, %v955
        %v957 = vrcp.pop %v905
        %v958 = vmul.f32 1.0, %v957
        %v959 = vrcp.pop %v906
        %v960 = vmul.f32 1.0, %v959
        %v961 = vrcp.pop %v907
        %v962 = vmul.f32 1.0, %v961
        %v963 = vrcp.pop %v908
        %v964 = vmul.f32 1.0, %v963
        %v965 = vrcp.pop %v909
        %v966 = vmul.f32 1.0, %v965
        %v967 = vrcp.pop %v910
        %v968 = vmul.f32 1.0, %v967
        %v969 = vrcp.pop %v911
        %v970 = vmul.f32 1.0, %v969
        %v971 = vrcp.pop %v912
        %v972 = vmul.f32 1.0, %v971
        %v973 = vrcp.pop %v913
        %v974 = vmul.f32 1.0, %v973
        %v975 = vrcp.pop %v914
        %v976 = vmul.f32 1.0, %v975
        %v977 = vrcp.pop %v915
        %v978 = vmul.f32 1.0, %v977
        %v979 = vrcp.pop %v916
        %v980 = vmul.f32 1.0, %v979
        %981 = vst [vmem:[%s164] sm:$0xff] %v918
        %982 = vst [vmem:[%s164 + $0x8] sm:$0xff] %v920
        %983 = vst [vmem:[%s164 + $0x10] sm:$0xff] %v922
        %984 = vst [vmem:[%s164 + $0x18] sm:$0xff] %v924
        %985 = vst [vmem:[%s164 + $0x20] sm:$0xff] %v926
        %986 = vst [vmem:[%s164 + $0x28] sm:$0xff] %v928
        %987 = vst [vmem:[%s164 + $0x30] sm:$0xff] %v930
        %988 = vst [vmem:[%s164 + $0x38] sm:$0xff] %v932
        %989 = vst [vmem:[%s164 + $0x40] sm:$0xff] %v934
        %990 = vst [vmem:[%s164 + $0x48] sm:$0xff] %v936
        %991 = vst [vmem:[%s164 + $0x50] sm:$0xff] %v938
        %992 = vst [vmem:[%s164 + $0x58] sm:$0xff] %v940
        %993 = vst [vmem:[%s164 + $0x60] sm:$0xff] %v942
        %994 = vst [vmem:[%s164 + $0x68] sm:$0xff] %v944
        %995 = vst [vmem:[%s164 + $0x70] sm:$0xff] %v946
        %996 = vst [vmem:[%s164 + $0x78] sm:$0xff] %v948
        %997 = vst [vmem:[%s164 + $0x80] sm:$0xff] %v950
        %998 = vst [vmem:[%s164 + $0x88] sm:$0xff] %v952
        %999 = vst [vmem:[%s164 + $0x90] sm:$0xff] %v954
        %1000 = vst [vmem:[%s164 + $0x98] sm:$0xff] %v956
        %1001 = vst [vmem:[%s164 + $0xa0] sm:$0xff] %v958
        %1002 = vst [vmem:[%s164 + $0xa8] sm:$0xff] %v960
        %1003 = vst [vmem:[%s164 + $0xb0] sm:$0xff] %v962
        %1004 = vst [vmem:[%s164 + $0xb8] sm:$0xff] %v964
        %1005 = vst [vmem:[%s164 + $0xc0] sm:$0xff] %v966
        %1006 = vst [vmem:[%s164 + $0xc8] sm:$0xff] %v968
        %1007 = vst [vmem:[%s164 + $0xd0] sm:$0xff] %v970
        %1008 = vst [vmem:[%s164 + $0xd8] sm:$0xff] %v972
        %1009 = vst [vmem:[%s164 + $0xe0] sm:$0xff] %v974
        %1010 = vst [vmem:[%s164 + $0xe8] sm:$0xff] %v976
        %1011 = vst [vmem:[%s164 + $0xf0] sm:$0xff] %v978
        %1012 = vst [vmem:[%s164 + $0xf8] sm:$0xff] %v980
        %s1013 = sand.u32 %s93, 1
        %s1014 = scalar_lea.sflag [#allocation3], %s1013
        %s1015 = sand.u32 %s93, 1
        %s1016 = smul.addr %s1015, 256
        %s1017 = scalar_lea.vmem [#allocation2], %s1016
        // Predicated region
        $region33: #{channel_attention.1} parent=31 // pred_check
          %p1018 = pneg %p103
        $region34: #{channel_attention.1} parent=31 // pred_check_branch
          %1020 = sbr.rel (%p1018) target = $region36
        $region35: #{channel_attention.1} parent=31 // pred_region
          %s1021 = smul.u32 32, %s17
          %s1023 = ssub.s32 4096, 4096
          %1024 = vsyncadd %s1014, %s1023
          %s1025 = smul.addr %s1021, 128
          %s1026 = scalar_lea.hbm %s3, %s1025
          %s1027 = sshll.u32 %s1017, 4
          %s1028 = int_to_ptr.vmem [resolvable:$true] %s1027
          %1033 = dma.vmem_to_hbm [thread:$0]  %s1028, 4096, %s1026, %s1014, 128, 128, 8
        $region36: #{channel_attention.1} parent=31 // pred_fallthru
          _
      $region32: #{channel_attention.1} parent=5 // pred_fallthru
        _
      %p1034 = scmp.le.s32.totalorder 2, %s12
      // Predicated region
      $region37: #{channel_attention.1} parent=5 // pred_check
        %p1035 = pneg %p1034
      $region38: #{channel_attention.1} parent=5 // pred_check_branch
        %1037 = sbr.rel (%p1035) target = $region40
      $region39: #{channel_attention.1} parent=5 // pred_region
        %s1038 = ssub.s32 %s12, 2
        // Predicated region
        $region41: #{channel_attention.1} parent=39 // pred_check
          %p1039 = pneg %p109
        $region42: #{channel_attention.1} parent=39 // pred_check_branch
          %1041 = sbr.rel (%p1039) target = $region44
        $region43: #{channel_attention.1} parent=39 // pred_region
          %s1042 = sand.u32 %s94, 1
          %s1043 = scalar_lea.sflag [#allocation3], %s1042
          %s1044 = sand.u32 %s94, 1
          %s1045 = smul.addr %s1044, 256
          %s1046 = scalar_lea.vmem [#allocation2], %s1045
          %1047 = dma.done %s1043, 4096
        $region44: #{channel_attention.1} parent=39 // pred_fallthru
          _
      $region40: #{channel_attention.1} parent=5 // pred_fallthru
        _
    $region6: #{channel_attention.1} parent=1 // loop_footer
      %s16 = sadd.s32 1, %s12
    $region7: #{channel_attention.1} parent=1 // loop_footer_branch
      %11 = sbr.rel target = $region3
    $region8: #{channel_attention.1} parent=1 // loop_exit
      _
    %1048 = vsyncpa [#allocation3], 1
    %s1049 = scalar_lea.sflag [#allocation3], 1
    %1050 = vsyncpa %s1049, 1

</llo_original>
